<compile_context>
chip_gen: v5e
topology: v5e:2x2
jax: 0.10.0
libtpu: 0.0.40
codegen_flags: <defaults>
</compile_context>

<pallas_src>
import functools
import math

import jax
import jax.numpy as jnp
from jax.experimental import pallas as pl
from jax.experimental.pallas import tpu as pltpu


def _pe_add_kernel(x_ref, pe_ref, o_ref, *, ts, s_axis):
    # x_ref / o_ref are (ts, D2) tiles (batch block dim squeezed away).
    # pe_ref is the full resident table (pe_rows, D2); slice the rows for
    # this sequence tile and do a straight elementwise VPU add.
    s = pl.program_id(s_axis)
    start = s * ts
    if ts % 8 == 0:
        start = pl.multiple_of(start, 8)
    o_ref[...] = x_ref[...] + pe_ref[pl.ds(start, ts), :]


def make_pe_table(d_model: int, max_len: int = 512, dtype=jnp.float32) -> jnp.ndarray:
    """Deterministic sin/cos positional-encoding table, shape (max_len, d_model).

    Build it once in the model dtype so the kernel wrapper never needs a
    per-call convert pass.  (Note: pre-casting to bf16 rounds pe before the
    add; error is <= 1 ulp vs adding in fp32.)
    """
    position = jnp.arange(max_len, dtype=jnp.float32)[:, None]            # (max_len, 1)
    div_term = jnp.exp(
        jnp.arange(0, d_model, 2, dtype=jnp.float32) * (-math.log(10000.0) / d_model)
    )                                                                     # (d_model//2,)
    angles = position * div_term                                          # (max_len, d_model//2)
    pe = jnp.zeros((max_len, d_model), dtype=jnp.float32)
    pe = pe.at[:, 0::2].set(jnp.sin(angles))
    pe = pe.at[:, 1::2].set(jnp.cos(angles))
    return pe.astype(dtype)


def _chip_budgets():
    """(target block bytes, vmem_limit cap) per TPU generation."""
    try:
        kind = jax.devices()[0].device_kind.lower()
    except Exception:
        kind = ""
    if "v7" in kind:
        return 4 << 20, 48 << 20          # v7x: 64 MiB physical VMEM per TC
    return 8 << 20, 64 << 20              # v5e / v6e: 128 MiB physical VMEM


def _lane_dense_view(S: int, D: int):
    """Fold g consecutive positions into the feature axis so the lane width is
    a multiple of 128. Returns (S2, D2, g); g == 1 means no regrouping."""
    if D % 128 == 0:
        return S, D, 1
    g = 128 // math.gcd(D, 128)
    if S % g == 0:
        return S // g, g * D, g
    # TODO(synk): for awkward (S, D) combos fold over the flattened B*S axis
    # (or pad D to 128) instead of falling back to lane-masked stores.
    return S, D, 1


def _choose_tile_rows(S2: int, D2: int, itemsize: int, target_bytes: int) -> int:
    """Rows per block: ~target_bytes, preferring an exact sublane-aligned
    divisor of S2 so no block is ragged/masked."""
    sub = max(8, 32 // itemsize)                 # 8 f32, 16 bf16, 32 int8
    row_cap = max(sub, target_bytes // (D2 * itemsize))
    if S2 <= row_cap:
        return S2                                # whole extent in one block
    for ts in range((row_cap // sub) * sub, 0, -sub):
        if S2 % ts == 0:
            return ts                            # exact tiling, unmasked vst
    return max(sub, (row_cap // sub) * sub)      # fallback: ragged last tile


def _add_pe(x: jnp.ndarray, pe: jnp.ndarray) -> jnp.ndarray:
    """out = x + pe[:S][None] for x of shape (B, S, D)."""
    B, S, D = x.shape
    assert S <= pe.shape[0], f"sequence length {S} exceeds pe max_len {pe.shape[0]}"
    assert pe.shape[1] == D, "pe feature dim must match x"

    # Prefer building the table in the model dtype; this is a no-op then.
    if pe.dtype != x.dtype:
        pe = pe.astype(x.dtype)

    # Lane-dense view of the (S, D) plane.
    S2, D2, g = _lane_dense_view(S, D)
    x2 = x.reshape(B, S2, D2)
    if pe.shape[0] % g == 0:
        pe2 = pe.reshape(pe.shape[0] // g, D2)   # full table, no per-call slice
    else:
        pe2 = pe[:S].reshape(S2, D2)             # rare: max_len not divisible by g

    itemsize = jnp.dtype(x.dtype).itemsize
    target_bytes, vmem_cap = _chip_budgets()
    ts = _choose_tile_rows(S2, D2, itemsize, target_bytes)
    num_s_tiles = pl.cdiv(S2, ts)

    # Guard the rare (ragged last tile AND S within ts of max_len) corner so
    # the in-kernel pl.ds slice never reads past the resident pe table.
    if num_s_tiles * ts > pe2.shape[0]:
        pe2 = jnp.pad(pe2, ((0, num_s_tiles * ts - pe2.shape[0]), (0, 0)))
    pe_rows = pe2.shape[0]

    block_bytes = ts * D2 * itemsize
    pe_bytes = pe_rows * D2 * itemsize
    # x + out blocks double-buffered, pe resident (<= 2 copies), plus headroom.
    vmem_limit = int(min(vmem_cap, max(16 << 20, 4 * block_bytes + 2 * pe_bytes + (4 << 20))))

    # v7x megacore balance: put an evenly-splittable axis first when possible.
    s_first = (num_s_tiles % 2 == 0) or (B % 2 != 0)
    if s_first:
        grid = (num_s_tiles, B)
        x_map = lambda s, b: (b, s, 0)
        pe_map = lambda s, b: (0, 0)
        s_axis = 0
    else:
        grid = (B, num_s_tiles)
        x_map = lambda b, s: (b, s, 0)
        pe_map = lambda b, s: (0, 0)
        s_axis = 1

    kernel = functools.partial(_pe_add_kernel, ts=ts, s_axis=s_axis)

    out2 = pl.pallas_call(
        kernel,
        out_shape=jax.ShapeDtypeStruct((B, S2, D2), x.dtype),
        grid_spec=pltpu.PrefetchScalarGridSpec(
            num_scalar_prefetch=0,
            grid=grid,
            in_specs=[
                pl.BlockSpec((pl.Squeezed(), ts, D2), x_map),      # x tile
                pl.BlockSpec((pe_rows, D2), pe_map),               # resident pe
            ],
            out_specs=pl.BlockSpec((pl.Squeezed(), ts, D2), x_map),
        ),
        compiler_params=pltpu.CompilerParams(
            dimension_semantics=("parallel", "parallel"),
            vmem_limit_bytes=vmem_limit,
        ),
    )(x2, pe2)

    return out2.reshape(B, S, D)


def positional_encoding(x: jnp.ndarray, pe: jnp.ndarray) -> jnp.ndarray:
    """Forward pass of PositionalEncoding (eval mode: dropout == identity)."""
    if x.ndim == 2:
        # PyTorch else-branch for (S, D) inputs: x + pe[:S] (works for S == 1 too).
        return _add_pe(x[None], pe)[0]
    if x.ndim == 3:
        if x.shape[1] > 1:
            return _add_pe(x, pe)
        # TODO(synk): degenerate 3-D branch (x.shape[1] == 1 adds pe[:batch]).
        raise NotImplementedError("3-D input with seq dim == 1 is not implemented")
    raise ValueError(f"expected 2-D or 3-D input, got ndim={x.ndim}")


if __name__ == "__main__":
    B, S, D = 2, 8, 32
    MAX_LEN = 512

    key = jax.random.PRNGKey(0)
    x = jax.random.normal(key, (B, S, D), dtype=jnp.float32)
    pe = make_pe_table(D, max_len=MAX_LEN, dtype=x.dtype)   # built once in model dtype

    # 3-D (B, S, D) branch.
    out = jax.block_until_ready(positional_encoding(x, pe))
    ref = x + pe[:S, :][None, :, :]
    assert out.shape == (B, S, D)
    assert jnp.allclose(out, ref, atol=1e-6, rtol=1e-6)

    # 2-D (S, D) branch.
    x2d = jax.random.normal(jax.random.PRNGKey(0), (S, D), dtype=jnp.float32)
    out2d = jax.block_until_ready(positional_encoding(x2d, pe))
    assert out2d.shape == (S, D)
    assert jnp.allclose(out2d, x2d + pe[:S, :], atol=1e-6, rtol=1e-6)

    print("KERNEL_OK")
</pallas_src>

<mosaic_0001>
module attributes {stable_mosaic.version = 11 : i64} {
  func.func @_pe_add_kernel(%arg0: i32, %arg1: i32, %arg2: memref<1x2x128xf32, #tpu.memory_space<vmem>>, %arg3: memref<128x128xf32, #tpu.memory_space<vmem>>, %arg4: memref<1x2x128xf32, #tpu.memory_space<vmem>>) attributes {dimension_semantics = [#tpu.dimension_semantics<parallel>, #tpu.dimension_semantics<parallel>], iteration_bounds = array<i64: 2, 1>, scalar_prefetch = 0 : i64, scratch_operands = 0 : i64, tpu.core_type = #tpu.core_type<tc>, window_params = [{transform_indices = @transform_0, window_bounds = array<i64: 1, 2, 128>}, {pipeline_mode = #tpu.pipeline_mode<synchronous>, transform_indices = @transform_1, window_bounds = array<i64: 128, 128>}, {transform_indices = @transform_2, window_bounds = array<i64: 1, 2, 128>}]} {
    %c2_i32 = arith.constant 2 : i32
    %0 = arith.muli %arg1, %c2_i32 : i32
    %c0 = arith.constant 0 : index
    %c0_0 = arith.constant 0 : index
    %c0_1 = arith.constant 0 : index
    %1 = vector.load %arg2[%c0, %c0_0, %c0_1] : memref<1x2x128xf32, #tpu.memory_space<vmem>>, vector<1x2x128xf32>
    %2 = vector.shape_cast %1 : vector<1x2x128xf32> to vector<2x128xf32>
    %3 = arith.index_cast %0 : i32 to index
    %c0_2 = arith.constant 0 : index
    %4 = vector.load %arg3[%3, %c0_2] : memref<128x128xf32, #tpu.memory_space<vmem>>, vector<2x128xf32>
    %5 = arith.addf %2, %4 : vector<2x128xf32>
    %c0_3 = arith.constant 0 : index
    %c0_4 = arith.constant 0 : index
    %c0_5 = arith.constant 0 : index
    %6 = vector.load %arg4[%c0_3, %c0_4, %c0_5] : memref<1x2x128xf32, #tpu.memory_space<vmem>>, vector<1x2x128xf32>
    %7 = vector.shape_cast %6 : vector<1x2x128xf32> to vector<2x128xf32>
    %8 = vector.shape_cast %5 : vector<2x128xf32> to vector<1x2x128xf32>
    tpu.vector_store %arg4[%c0_3, %c0_4, %c0_5], %8 {strides = array<i32>} : memref<1x2x128xf32, #tpu.memory_space<vmem>>, vector<1x2x128xf32>,
    return
  }
  func.func @transform_0(%arg0: i32, %arg1: i32) -> (i32, i32, i32) {
    %c0_i32 = arith.constant 0 : i32
    %c0_i32_0 = arith.constant 0 : i32
    return %arg0, %arg1, %c0_i32 : i32, i32, i32
  }
  func.func @transform_1(%arg0: i32, %arg1: i32) -> (i32, i32) {
    %c0_i32 = arith.constant 0 : i32
    %c0_i32_0 = arith.constant 0 : i32
    %c0_i32_1 = arith.constant 0 : i32
    return %c0_i32, %c0_i32_0 : i32, i32
  }
  func.func @transform_2(%arg0: i32, %arg1: i32) -> (i32, i32, i32) {
    %c0_i32 = arith.constant 0 : i32
    %c0_i32_0 = arith.constant 0 : i32
    return %arg0, %arg1, %c0_i32 : i32, i32, i32
  }
}

</mosaic_0001>

<llo_original>
// kernel: tpu_custom_call.1
$region0: #{tpu_custom_call.1}
  #allocation0 [shape = 'u32[]', space=smem, size = 0x4, offset = 0x4, fixed_abs, tag = 'smem constant byte address 0x4 - core index']
  #allocation1 [shape = 'u32[72,128]{1,0:T(1,128)}', space=vmem, size = 0x9000, scoped, tag = 'internal scratch']
  %s0 = inlined_call_operand.hbm [shape: f32[2,2,128], index: 0, kind: input, shape index: {}]
  %s1 = inlined_call_operand.hbm [shape: f32[128,128], index: 1, kind: input, shape index: {}]
  %s2 = inlined_call_operand.hbm [shape: f32[2,2,128], index: 2, kind: output, shape index: {}]
  %s3 = sld [smem:[#allocation0]]
  $region49: #{tpu_custom_call.1} parent=0
    _
  %s5 = ssub.s32 1, %s3
  %s6 = scalar_select 0, %s5, %s3
  $region1: #{tpu_custom_call.1} parent=0
    #allocation2 [shape = 'u8[2048]{0}', space=vmem, size = 0x800, scoped, tag = 'input window, operand 0']
    #allocation3 [shape = 's32[2]{0}', space=sflag, size = 0x8, scoped, tag = 'scoped memory for tpu_custom_call.1']
    #allocation4 [shape = 's32[2]{0}', space=sflag, size = 0x8, scoped, tag = 'scoped memory for tpu_custom_call.1']
    #allocation5 [shape = 'u8[65536]{0}', space=vmem, size = 0x10000, scoped, tag = 'input window, operand 1, single buffered']
    #allocation6 [shape = 's32[1]{0}', space=sflag, size = 0x4, scoped, tag = 'scoped memory for tpu_custom_call.1']
    #allocation7 [shape = 'u8[2048]{0}', space=vmem, size = 0x800, scoped, tag = 'output window, operand 0']
    %7 = vsyncpa [#allocation3], 0
    %s8 = scalar_lea.sflag [#allocation3], 1
    %9 = vsyncpa %s8, 0
    %10 = vsyncpa [#allocation6], 0
    %11 = vsyncpa [#allocation4], 0
    %s12 = scalar_lea.sflag [#allocation4], 1
    %13 = vsyncpa %s12, 0
    loop: start=0, step=1, limit=4
    $region2: #{tpu_custom_call.1} parent=1 // loop_pre_header
      _
    $region3: #{tpu_custom_call.1} parent=1 // loop_header
      %s15 = sphi 0, %s19
      %p16 = scmp.ge.s32.totalorder %s15, 4
      %s22 = sphi 0, %s34
      %s23 = sphi 0, %s30
      %s24 = sphi 0, %s22
      %s25 = sphi 0, %s23
      %s26 = sphi 0, %s24
      %s27 = sphi 0, %s25
      %s39 = sphi 0, %s41
      %s42 = sphi 0, %s39
      %s43 = sphi 0, %s42
      %s59 = sphi 0, %s43
      %s63 = sphi 0, %s63
      %s65 = sphi 0, %s63
      %s66 = sphi 0, %s65
      %s80 = sphi 0, %s66
      %s88 = sphi 0, %s90
      %s91 = sphi 0, %s88
      %s92 = sphi 0, %s91
      %s108 = sphi 0, %s92
    $region4: #{tpu_custom_call.1} parent=1 // loop_header_branch
      %18 = sbr.rel (%p16) target = $region8
    $region5: #{tpu_custom_call.1} parent=1 // loop_body
      %s20 = ssub.s32 %s15, 1
      %s21 = ssub.s32 %s15, 2
      %s28 = sadd.s32 1, %s23
      %p29 = scmp.ge.s32.totalorder %s28, 1
      %s30 = scalar_select %p29, 0, %s28
      %s31 = sadd.s32 1, %s22
      %s32 = scalar_select %p29, %s31, %s22
      %p33 = scmp.ge.s32.totalorder %s32, 2
      %s34 = scalar_select %p33, 0, %s32
      %s35 = ssub.s32 %s22, %s34
      %s36 = ssub.s32 %s23, %s30
      %s37 = sor.u32 %s35, %s36
      %p38 = scmp.eq.s32.totalorder %s37, 0
      %s40 = sadd.s32 %s39, 1
      %s41 = scalar_select %p38, %s39, %s40
      %p44 = pneg %p38
      %p45 = scmp.eq.s32.totalorder %s15, 1
      %p46 = por %p44, %p45
      %p47 = scmp.ne.s32.totalorder %s39, %s42
      %p48 = scmp.eq.s32.totalorder %s15, 0
      %p49 = por %p47, %p48
      %p50 = scmp.ne.s32.totalorder %s39, %s42
      %p51 = scmp.eq.s32.totalorder %s20, 1
      %p52 = por %p50, %p51
      %p53 = scmp.ne.s32.totalorder %s42, %s43
      %p54 = scmp.eq.s32.totalorder %s20, 0
      %p55 = por %p53, %p54
      %p56 = scmp.ne.s32.totalorder %s42, %s43
      %p57 = scmp.eq.s32.totalorder %s21, 1
      %p58 = por %p56, %p57
      %p60 = scmp.ne.s32.totalorder %s43, %s59
      %p61 = scmp.eq.s32.totalorder %s21, 0
      %p62 = por %p60, %p61
      %s64 = sadd.s32 %s63, 1
      %p67 = scmp.eq.s32.totalorder %s15, 1
      %p68 = scmp.ne.s32.totalorder %s63, %s65
      %p69 = scmp.eq.s32.totalorder %s15, 0
      %p70 = por %p68, %p69
      %p71 = scmp.ne.s32.totalorder %s63, %s65
      %p72 = scmp.eq.s32.totalorder %s20, 1
      %p73 = por %p71, %p72
      %p74 = scmp.ne.s32.totalorder %s65, %s66
      %p75 = scmp.eq.s32.totalorder %s20, 0
      %p76 = por %p74, %p75
      %p77 = scmp.ne.s32.totalorder %s65, %s66
      %p78 = scmp.eq.s32.totalorder %s21, 1
      %p79 = por %p77, %p78
      %p81 = scmp.ne.s32.totalorder %s66, %s80
      %p82 = scmp.eq.s32.totalorder %s21, 0
      %p83 = por %p81, %p82
      %s84 = ssub.s32 %s22, %s34
      %s85 = ssub.s32 %s23, %s30
      %s86 = sor.u32 %s84, %s85
      %p87 = scmp.eq.s32.totalorder %s86, 0
      %s89 = sadd.s32 %s88, 1
      %s90 = scalar_select %p87, %s88, %s89
      %p93 = pneg %p87
      %p94 = scmp.eq.s32.totalorder %s15, 1
      %p95 = por %p93, %p94
      %p96 = scmp.ne.s32.totalorder %s88, %s91
      %p97 = scmp.eq.s32.totalorder %s15, 0
      %p98 = por %p96, %p97
      %p99 = scmp.ne.s32.totalorder %s88, %s91
      %p100 = scmp.eq.s32.totalorder %s20, 1
      %p101 = por %p99, %p100
      %p102 = scmp.ne.s32.totalorder %s91, %s92
      %p103 = scmp.eq.s32.totalorder %s20, 0
      %p104 = por %p102, %p103
      %p105 = scmp.ne.s32.totalorder %s91, %s92
      %p106 = scmp.eq.s32.totalorder %s21, 1
      %p107 = por %p105, %p106
      %p109 = scmp.ne.s32.totalorder %s92, %s108
      %p110 = scmp.eq.s32.totalorder %s21, 0
      %p111 = por %p109, %p110
      %p112 = scmp.le.s32.totalorder 1, %s15
      %p113 = scmp.lt.s32.totalorder %s15, 3
      %p114 = pnand %p112, %p113
      %p115 = pneg %p114
      // Predicated region
      $region9: #{tpu_custom_call.1} parent=5 // pred_check
        _
      $region10: #{tpu_custom_call.1} parent=5 // pred_check_branch
        %117 = sbr.rel (%p114) target = $region12
      $region11: #{tpu_custom_call.1} parent=5 // pred_region
        %s118 = ssub.s32 %s15, 1
        // Predicated region
        $region13: #{tpu_custom_call.1} parent=11 // pred_check
          %p119 = pneg %p76
        $region14: #{tpu_custom_call.1} parent=11 // pred_check_branch
          %121 = sbr.rel (%p119) target = $region16
        $region15: #{tpu_custom_call.1} parent=11 // pred_region
          %123 = vsyncadd [#allocation6], 0
          %s124 = sshll.u32 %s1, 4
          %s125 = int_to_ptr.hbm [resolvable:$true] %s124
          %s126 = sshll.u32 [#allocation5], 4
          %s127 = int_to_ptr.vmem [resolvable:$true] %s126
          %132 = dma.hbm_to_vmem [thread:$0]  %s125, 2048, %s127, [#allocation6], 128, 128, 8
        $region16: #{tpu_custom_call.1} parent=11 // pred_fallthru
          _
      $region12: #{tpu_custom_call.1} parent=5 // pred_fallthru
        _
      %p133 = scmp.lt.s32.totalorder %s15, 2
      // Predicated region
      $region17: #{tpu_custom_call.1} parent=5 // pred_check
        %p134 = pneg %p133
      $region18: #{tpu_custom_call.1} parent=5 // pred_check_branch
        %136 = sbr.rel (%p134) target = $region20
      $region19: #{tpu_custom_call.1} parent=5 // pred_region
        // Predicated region
        $region21: #{tpu_custom_call.1} parent=19 // pred_check
          %p137 = pneg %p49
        $region22: #{tpu_custom_call.1} parent=19 // pred_check_branch
          %139 = sbr.rel (%p137) target = $region24
        $region23: #{tpu_custom_call.1} parent=19 // pred_region
          %s140 = sand.u32 %s39, 1
          %s141 = scalar_lea.sflag [#allocation3], %s140
          %s142 = sand.u32 %s39, 1
          %s143 = smul.addr %s142, 2
          %s144 = scalar_lea.vmem [#allocation2], %s143
          %146 = vsyncadd %s141, 0
          %s147 = sadd.s32 %s23, %s22
          %s148 = smul.addr %s147, 2
          %s149 = scalar_lea.hbm %s0, %s148
          %s151 = sshll.u32 %s149, 4
          %s152 = int_to_ptr.hbm [resolvable:$true] %s151
          %s153 = sshll.u32 %s144, 4
          %s154 = int_to_ptr.vmem [resolvable:$true] %s153
          %156 = dma.hbm_to_vmem [thread:$0]  %s152, 32, %s154, %s141
        $region24: #{tpu_custom_call.1} parent=19 // pred_fallthru
          _
      $region20: #{tpu_custom_call.1} parent=5 // pred_fallthru
        _
      %p157 = scmp.le.s32.totalorder 1, %s15
      %p158 = scmp.lt.s32.totalorder %s15, 3
      %p159 = pnand %p157, %p158
      %p160 = pneg %p159
      // Predicated region
      $region25: #{tpu_custom_call.1} parent=5 // pred_check
        _
      $region26: #{tpu_custom_call.1} parent=5 // pred_check_branch
        %162 = sbr.rel (%p159) target = $region28
      $region27: #{tpu_custom_call.1} parent=5 // pred_region
        %s163 = ssub.s32 %s15, 1
        %s164 = sand.u32 %s42, 1
        %s165 = scalar_lea.sflag [#allocation3], %s164
        %s166 = sand.u32 %s42, 1
        %s167 = smul.addr %s166, 2
        %s168 = scalar_lea.vmem [#allocation2], %s167
        // Predicated region
        $region29: #{tpu_custom_call.1} parent=27 // pred_check
          %p169 = pneg %p55
        $region30: #{tpu_custom_call.1} parent=27 // pred_check_branch
          %171 = sbr.rel (%p169) target = $region32
        $region31: #{tpu_custom_call.1} parent=27 // pred_region
          %173 = dma.done %s165, 32
        $region32: #{tpu_custom_call.1} parent=27 // pred_fallthru
          _
        // Predicated region
        $region33: #{tpu_custom_call.1} parent=27 // pred_check
          %p174 = pneg %p76
        $region34: #{tpu_custom_call.1} parent=27 // pred_check_branch
          %176 = sbr.rel (%p174) target = $region36
        $region35: #{tpu_custom_call.1} parent=27 // pred_region
          %178 = dma.done [#allocation6], 2048
        $region36: #{tpu_custom_call.1} parent=27 // pred_fallthru
          _
        %s179 = sand.u32 %s42, 1
        %s180 = scalar_lea.sflag [#allocation3], %s179
        %s181 = sand.u32 %s42, 1
        %s182 = smul.addr %s181, 2
        %s183 = scalar_lea.vmem [#allocation2], %s182
        %p184 = pneg %p55
        %p185 = pneg %p52
        %p186 = pneg %p76
        %p187 = pneg %p73
        %p188 = pneg %p104
        %p189 = pneg %p101
        %s190 = sand.u32 %s91, 1
        %s191 = scalar_lea.sflag [#allocation4], %s190
        %s192 = sand.u32 %s91, 1
        %s193 = smul.addr %s192, 2
        %s194 = scalar_lea.vmem [#allocation7], %s193
        %s195 = smul.u32 %s25, 2
        %v196 = vld [vmem:[%s168] sm:$0x3]
        %s197 = scalar_lea.vmem [#allocation5], %s195
        %v198 = vld [vmem:[%s197] sm:$0x3]
        %v199 = vadd.f32 %v196, %v198
        %200 = vst [vmem:[%s194] sm:$0x3] %v199
        %s201 = sand.u32 %s91, 1
        %s202 = scalar_lea.sflag [#allocation4], %s201
        %s203 = sand.u32 %s91, 1
        %s204 = smul.addr %s203, 2
        %s205 = scalar_lea.vmem [#allocation7], %s204
        // Predicated region
        $region37: #{tpu_custom_call.1} parent=27 // pred_check
          %p206 = pneg %p101
        $region38: #{tpu_custom_call.1} parent=27 // pred_check_branch
          %208 = sbr.rel (%p206) target = $region40
        $region39: #{tpu_custom_call.1} parent=27 // pred_region
          %210 = vsyncadd %s202, 0
          %s211 = sadd.s32 %s25, %s24
          %s212 = smul.addr %s211, 2
          %s213 = scalar_lea.hbm %s2, %s212
          %s215 = sshll.u32 %s205, 4
          %s216 = int_to_ptr.vmem [resolvable:$true] %s215
          %s217 = sshll.u32 %s213, 4
          %s218 = int_to_ptr.hbm [resolvable:$true] %s217
          %220 = dma.vmem_to_hbm [thread:$0]  %s216, 32, %s218, %s202
        $region40: #{tpu_custom_call.1} parent=27 // pred_fallthru
          _
      $region28: #{tpu_custom_call.1} parent=5 // pred_fallthru
        _
      %p221 = scmp.le.s32.totalorder 2, %s15
      // Predicated region
      $region41: #{tpu_custom_call.1} parent=5 // pred_check
        %p222 = pneg %p221
      $region42: #{tpu_custom_call.1} parent=5 // pred_check_branch
        %224 = sbr.rel (%p222) target = $region44
      $region43: #{tpu_custom_call.1} parent=5 // pred_region
        %s225 = ssub.s32 %s15, 2
        // Predicated region
        $region45: #{tpu_custom_call.1} parent=43 // pred_check
          %p226 = pneg %p107
        $region46: #{tpu_custom_call.1} parent=43 // pred_check_branch
          %228 = sbr.rel (%p226) target = $region48
        $region47: #{tpu_custom_call.1} parent=43 // pred_region
          %s229 = sand.u32 %s92, 1
          %s230 = scalar_lea.sflag [#allocation4], %s229
          %s231 = sand.u32 %s92, 1
          %s232 = smul.addr %s231, 2
          %s233 = scalar_lea.vmem [#allocation7], %s232
          %235 = dma.done %s230, 32
        $region48: #{tpu_custom_call.1} parent=43 // pred_fallthru
          _
      $region44: #{tpu_custom_call.1} parent=5 // pred_fallthru
        _
    $region6: #{tpu_custom_call.1} parent=1 // loop_footer
      %s19 = sadd.s32 1, %s15
    $region7: #{tpu_custom_call.1} parent=1 // loop_footer_branch
      %14 = sbr.rel target = $region3
    $region8: #{tpu_custom_call.1} parent=1 // loop_exit
      _
    %236 = vsyncpa [#allocation3], 1
    %s237 = scalar_lea.sflag [#allocation3], 1
    %238 = vsyncpa %s237, 1
    %239 = vsyncpa [#allocation6], 1
    %240 = vsyncpa [#allocation4], 1
    %s241 = scalar_lea.sflag [#allocation4], 1
    %242 = vsyncpa %s241, 1

</llo_original>
